<compile_context>
chip_gen: v6e
topology: v6e:2x2x1
jax: 0.10.0
libtpu: 0.0.40
codegen_flags: <defaults>
</compile_context>

<pallas_src>
import jax
import jax.numpy as jnp
from jax.experimental import pallas as pl
from jax.experimental.pallas import tpu as pltpu


def _orthogonal(key, rows, cols, gain=1.0, dtype=jnp.float32):
    """Deterministic orthogonal init (same semantics as nn.init.orthogonal_)."""
    n = max(rows, cols)
    a = jax.random.normal(key, (n, n), dtype=jnp.float32)
    q, r = jnp.linalg.qr(a)
    d = jnp.sign(jnp.diag(r))
    d = jnp.where(d == 0, 1.0, d)  # guard the (measure-zero) zero-diagonal case
    q = q * d[None, :]
    return (gain * q[:rows, :cols]).astype(dtype)


def value_mlp_kernel(x_ref, w1_ref, b1_ref, w2_ref, b2_ref, w3_ref, b3_ref, o_ref):
    # fc1: (TB, D) @ (D, Hp) on the MXU (bf16 operands, f32 accumulate); bias+ReLU in f32.
    h1 = jnp.dot(x_ref[...], w1_ref[...], preferred_element_type=jnp.float32)
    h1 = jnp.maximum(h1 + b1_ref[...], 0.0)
    # fc2: cast the activation back to the MXU operand dtype; accumulate in f32.
    h2 = jnp.dot(h1.astype(w2_ref.dtype), w2_ref[...],
                 preferred_element_type=jnp.float32)
    h2 = jnp.maximum(h2 + b2_ref[...], 0.0)
    # fc3 (output width 1): keep off the MXU -- VPU multiply + XLU lane reduction (f32),
    # then the SMEM scalar bias.
    v = jnp.sum(h2 * w3_ref[...], axis=-1, keepdims=True) + b3_ref[0, 0]   # (TB, 1)
    # Lane-dense store: (TB, 1) -> (1, TB) so the writeback is an unmasked full-width vst.
    o_ref[...] = jnp.transpose(v).astype(o_ref.dtype)


def _choose_batch_tile(B, block_b):
    """Pick a batch tile: full batch when tiny, else >=2 (ideally even #) 128-aligned tiles."""
    block_b = max(128, (block_b // 128) * 128)
    if B < 256:
        return B                       # single tile; block == full array dims is always legal
    n = max(2, pl.cdiv(B, block_b))    # at least 2 tiles so both v7x TensorCores get work
    if n % 2:
        n += 1                         # even grid -> balanced megacore split
    tb = ((pl.cdiv(B, n) + 127) // 128) * 128
    return min(tb, block_b)


def value_network_forward(x, params, *, block_b=4096, use_bf16=True):
    """x: (B, input_dim) float32.  Returns (B, 1) float32."""
    w1, b1, w2, b2, w3, b3 = params
    B, D = x.shape
    H = w1.shape[1]
    LANE = 128

    # Zero-pad the hidden dim to a full 128-lane width (bit-identical: padded columns stay
    # exactly 0 through bias-add/ReLU, and fc3's padded weights are 0).
    Hp = ((H + LANE - 1) // LANE) * LANE
    if Hp != H:
        w1 = jnp.pad(w1, ((0, 0), (0, Hp - H)))
        b1 = jnp.pad(b1, ((0, 0), (0, Hp - H)))
        w2 = jnp.pad(w2, ((0, Hp - H), (0, Hp - H)))
        b2 = jnp.pad(b2, ((0, 0), (0, Hp - H)))
        w3 = jnp.pad(w3, ((0, 0), (0, Hp - H)))

    mxu_dtype = jnp.bfloat16 if use_bf16 else jnp.float32
    x_in = x.astype(mxu_dtype)
    w1 = w1.astype(mxu_dtype)
    w2 = w2.astype(mxu_dtype)
    b1 = b1.astype(jnp.float32)
    b2 = b2.astype(jnp.float32)
    w3 = w3.astype(jnp.float32)
    b3 = b3.astype(jnp.float32).reshape(1, 1)

    TB = _choose_batch_tile(B, block_b)
    grid = (pl.cdiv(B, TB),)

    def resident(shape):  # weight/bias tiles that stay resident in VMEM
        return pl.BlockSpec(shape, lambda i: (0, 0))

    itemsize = 2 if use_bf16 else 4
    cost = pl.CostEstimate(
        flops=2 * B * (D * Hp + Hp * Hp + Hp),
        transcendentals=0,
        bytes_accessed=itemsize * (B * D + D * Hp + Hp * Hp) + 4 * (B + 3 * Hp + 1),
    )

    out = pl.pallas_call(
        value_mlp_kernel,
        # Lane-dense (1, B) output; reshaped to (B, 1) below (free at the XLA level).
        out_shape=jax.ShapeDtypeStruct((1, B), jnp.float32),
        grid=grid,
        in_specs=[
            pl.BlockSpec((TB, D), lambda i: (i, 0)),            # x: tiled over batch
            resident((D, Hp)),                                  # w1 (VMEM-resident)
            resident((1, Hp)),                                  # b1
            resident((Hp, Hp)),                                 # w2
            resident((1, Hp)),                                  # b2
            resident((1, Hp)),                                  # w3 (row vector)
            pl.BlockSpec(memory_space=pltpu.MemorySpace.SMEM),  # b3 scalar in SMEM
        ],
        out_specs=pl.BlockSpec((1, TB), lambda i: (0, i)),
        compiler_params=pltpu.CompilerParams(
            # "parallel" lets the runtime shard batch tiles across v7x TensorCores;
            # grid is kept >=2 (even) so neither core idles.
            dimension_semantics=("parallel",),
            # Explicit scoped-VMEM budget (v5e default is only 16 MiB); ~8 MiB used at
            # block_b=4096 -- raise this if you sweep block_b past ~8192.
            vmem_limit_bytes=32 * 1024 * 1024,
        ),
        cost_estimate=cost,
    )(x_in, w1, b1, w2, b2, w3, b3)
    return out.reshape(B, 1)


def init_value_network_params(key, input_dim, hidden_dim=64):
    k1, k2, k3 = jax.random.split(key, 3)
    # PyTorch weight is (out, in); store transposes for x @ W, except fc3 which
    # stays in its native (1, hidden) row layout for the in-kernel reduction.
    w1 = _orthogonal(k1, input_dim, hidden_dim)      # fc1.weight.T  (D, H)
    b1 = jnp.zeros((1, hidden_dim), jnp.float32)
    w2 = _orthogonal(k2, hidden_dim, hidden_dim)     # fc2.weight.T  (H, H)
    b2 = jnp.zeros((1, hidden_dim), jnp.float32)
    w3 = _orthogonal(k3, 1, hidden_dim)              # fc3.weight    (1, H)
    b3 = jnp.zeros((1, 1), jnp.float32)
    return (w1, b1, w2, b2, w3, b3)


def value_network_ref(x, params, *, use_bf16=True):
    """Pure-JAX reference (mirrors the kernel's MXU operand dtype)."""
    w1, b1, w2, b2, w3, b3 = params
    dt = jnp.bfloat16 if use_bf16 else jnp.float32
    h1 = jnp.maximum(
        jnp.dot(x.astype(dt), w1.astype(dt), preferred_element_type=jnp.float32) + b1, 0.0)
    h2 = jnp.maximum(
        jnp.dot(h1.astype(dt), w2.astype(dt), preferred_element_type=jnp.float32) + b2, 0.0)
    return jnp.sum(h2 * w3, axis=-1, keepdims=True) + b3


if __name__ == "__main__":
    key = jax.random.PRNGKey(0)
    k_param, k_x, k_x2 = jax.random.split(key, 3)

    input_dim = 32
    hidden_dim = 64
    batch = 8

    params = init_value_network_params(k_param, input_dim, hidden_dim)

    # Small-shape check (single full-batch tile, single grid step).
    x = jax.random.normal(k_x, (batch, input_dim), dtype=jnp.float32)
    out = jax.block_until_ready(value_network_forward(x, params))
    ref = value_network_ref(x, params)
    ref_f32 = value_network_ref(x, params, use_bf16=False)
    assert out.shape == (batch, 1), out.shape
    assert jnp.allclose(out, ref, atol=1e-4, rtol=1e-4), "mismatch vs bf16-matched reference (small)"
    assert jnp.allclose(out, ref_f32, atol=1e-1), "mismatch vs f32 reference (small, loose)"

    # Multi-tile grid path: two lane-aligned 512-row tiles, pipelined / megacore-parallel,
    # lane-dense (1, B) writeback.
    x_big = jax.random.normal(k_x2, (1024, input_dim), dtype=jnp.float32)
    out_big = jax.block_until_ready(value_network_forward(x_big, params))
    ref_big = value_network_ref(x_big, params)
    assert out_big.shape == (1024, 1), out_big.shape
    assert jnp.allclose(out_big, ref_big, atol=1e-4, rtol=1e-4), "mismatch vs bf16-matched reference (large)"

    print("KERNEL_OK")
</pallas_src>

<mosaic_0001>
module attributes {stable_mosaic.version = 11 : i64} {
  func.func @value_mlp_kernel(%arg0: i32, %arg1: memref<8x32xbf16, #tpu.memory_space<vmem>>, %arg2: memref<32x128xbf16, #tpu.memory_space<vmem>>, %arg3: memref<1x128xf32, #tpu.memory_space<vmem>>, %arg4: memref<128x128xbf16, #tpu.memory_space<vmem>>, %arg5: memref<1x128xf32, #tpu.memory_space<vmem>>, %arg6: memref<1x128xf32, #tpu.memory_space<vmem>>, %arg7: memref<1x1xf32, #tpu.memory_space<smem>>, %arg8: memref<1x8xf32, #tpu.memory_space<vmem>>) attributes {dimension_semantics = [#tpu.dimension_semantics<parallel>], iteration_bounds = array<i64: 1>, scalar_prefetch = 0 : i64, scratch_operands = 0 : i64, tpu.core_type = #tpu.core_type<tc>, window_params = [{transform_indices = @transform_0, window_bounds = array<i64: 8, 32>}, {pipeline_mode = #tpu.pipeline_mode<synchronous>, transform_indices = @transform_1, window_bounds = array<i64: 32, 128>}, {pipeline_mode = #tpu.pipeline_mode<synchronous>, transform_indices = @transform_2, window_bounds = array<i64: 1, 128>}, {pipeline_mode = #tpu.pipeline_mode<synchronous>, transform_indices = @transform_3, window_bounds = array<i64: 128, 128>}, {pipeline_mode = #tpu.pipeline_mode<synchronous>, transform_indices = @transform_4, window_bounds = array<i64: 1, 128>}, {pipeline_mode = #tpu.pipeline_mode<synchronous>, transform_indices = @transform_5, window_bounds = array<i64: 1, 128>}, {transform_indices = @transform_6, window_bounds = array<i64: 1, 1>}, {transform_indices = @transform_7, window_bounds = array<i64: 1, 8>}]} {
    %c0 = arith.constant 0 : index
    %c0_0 = arith.constant 0 : index
    %0 = vector.load %arg1[%c0, %c0_0] : memref<8x32xbf16, #tpu.memory_space<vmem>>, vector<8x32xbf16>
    %c0_1 = arith.constant 0 : index
    %c0_2 = arith.constant 0 : index
    %1 = vector.load %arg2[%c0_1, %c0_2] : memref<32x128xbf16, #tpu.memory_space<vmem>>, vector<32x128xbf16>
    %cst = arith.constant dense<0.000000e+00> : vector<8x128xf32>
    %2 = tpu.matmul %0, %1, %cst {dimension_numbers = #tpu.dot_dimension_numbers<[1], [0], [0], [1], [0, 0, 1, 1], [], []>} : vector<8x32xbf16>, vector<32x128xbf16>, vector<8x128xf32> -> vector<8x128xf32>
    %c0_3 = arith.constant 0 : index
    %c0_4 = arith.constant 0 : index
    %3 = vector.load %arg3[%c0_3, %c0_4] : memref<1x128xf32, #tpu.memory_space<vmem>>, vector<1x128xf32>
    %4 = vector.broadcast %3 : vector<1x128xf32> to vector<8x128xf32>
    %5 = arith.addf %2, %4 : vector<8x128xf32>
    %cst_5 = arith.constant 0.000000e+00 : f32
    %6 = vector.broadcast %cst_5 : f32 to vector<8x128xf32>
    %7 = arith.maximumf %5, %6 : vector<8x128xf32>
    %8 = arith.truncf %7 : vector<8x128xf32> to vector<8x128xbf16>
    %c0_6 = arith.constant 0 : index
    %c0_7 = arith.constant 0 : index
    %9 = vector.load %arg4[%c0_6, %c0_7] : memref<128x128xbf16, #tpu.memory_space<vmem>>, vector<128x128xbf16>
    %cst_8 = arith.constant dense<0.000000e+00> : vector<8x128xf32>
    %10 = tpu.matmul %8, %9, %cst_8 {dimension_numbers = #tpu.dot_dimension_numbers<[1], [0], [0], [1], [0, 0, 1, 1], [], []>} : vector<8x128xbf16>, vector<128x128xbf16>, vector<8x128xf32> -> vector<8x128xf32>
    %c0_9 = arith.constant 0 : index
    %c0_10 = arith.constant 0 : index
    %11 = vector.load %arg5[%c0_9, %c0_10] : memref<1x128xf32, #tpu.memory_space<vmem>>, vector<1x128xf32>
    %12 = vector.broadcast %11 : vector<1x128xf32> to vector<8x128xf32>
    %13 = arith.addf %10, %12 : vector<8x128xf32>
    %cst_11 = arith.constant 0.000000e+00 : f32
    %14 = vector.broadcast %cst_11 : f32 to vector<8x128xf32>
    %15 = arith.maximumf %13, %14 : vector<8x128xf32>
    %c0_12 = arith.constant 0 : index
    %c0_13 = arith.constant 0 : index
    %16 = vector.load %arg6[%c0_12, %c0_13] : memref<1x128xf32, #tpu.memory_space<vmem>>, vector<1x128xf32>
    %17 = vector.broadcast %16 : vector<1x128xf32> to vector<8x128xf32>
    %18 = arith.mulf %15, %17 : vector<8x128xf32>
    %cst_14 = arith.constant dense<0.000000e+00> : vector<8xf32>
    %19 = vector.multi_reduction <add>, %18, %cst_14 [1] : vector<8x128xf32> to vector<8xf32>
    %20 = vector.shape_cast %19 : vector<8xf32> to vector<8x1xf32>
    %c0_15 = arith.constant 0 : index
    %c0_16 = arith.constant 0 : index
    %21 = memref.load %arg7[%c0_15, %c0_16] : memref<1x1xf32, #tpu.memory_space<smem>>
    %22 = vector.broadcast %21 : f32 to vector<8x1xf32>
    %23 = arith.addf %20, %22 : vector<8x1xf32>
    %24 = tpu.transpose %23, [1, 0] : vector<8x1xf32> -> vector<1x8xf32>
    %c0_17 = arith.constant 0 : index
    %c0_18 = arith.constant 0 : index
    %25 = vector.load %arg8[%c0_17, %c0_18] : memref<1x8xf32, #tpu.memory_space<vmem>>, vector<1x8xf32>
    tpu.vector_store %arg8[%c0_17, %c0_18], %24 {strides = array<i32>} : memref<1x8xf32, #tpu.memory_space<vmem>>, vector<1x8xf32>,
    return
  }
  func.func @transform_0(%arg0: i32) -> (i32, i32) {
    %c0_i32 = arith.constant 0 : i32
    %c0_i32_0 = arith.constant 0 : i32
    return %arg0, %c0_i32 : i32, i32
  }
  func.func @transform_1(%arg0: i32) -> (i32, i32) {
    %c0_i32 = arith.constant 0 : i32
    %c0_i32_0 = arith.constant 0 : i32
    %c0_i32_1 = arith.constant 0 : i32
    return %c0_i32, %c0_i32_0 : i32, i32
  }
  func.func @transform_2(%arg0: i32) -> (i32, i32) {
    %c0_i32 = arith.constant 0 : i32
    %c0_i32_0 = arith.constant 0 : i32
    %c0_i32_1 = arith.constant 0 : i32
    return %c0_i32, %c0_i32_0 : i32, i32
  }
  func.func @transform_3(%arg0: i32) -> (i32, i32) {
    %c0_i32 = arith.constant 0 : i32
    %c0_i32_0 = arith.constant 0 : i32
    %c0_i32_1 = arith.constant 0 : i32
    return %c0_i32, %c0_i32_0 : i32, i32
  }
  func.func @transform_4(%arg0: i32) -> (i32, i32) {
    %c0_i32 = arith.constant 0 : i32
    %c0_i32_0 = arith.constant 0 : i32
    %c0_i32_1 = arith.constant 0 : i32
    return %c0_i32, %c0_i32_0 : i32, i32
  }
  func.func @transform_5(%arg0: i32) -> (i32, i32) {
    %c0_i32 = arith.constant 0 : i32
    %c0_i32_0 = arith.constant 0 : i32
    %c0_i32_1 = arith.constant 0 : i32
    return %c0_i32, %c0_i32_0 : i32, i32
  }
  func.func @transform_6(%arg0: i32) -> (i32, i32) {
    %c0_i32 = arith.constant 0 : i32
    %c0_i32_0 = arith.constant 0 : i32
    %c0_i32_1 = arith.constant 0 : i32
    return %c0_i32, %c0_i32_0 : i32, i32
  }
  func.func @transform_7(%arg0: i32) -> (i32, i32) {
    %c0_i32 = arith.constant 0 : i32
    %c0_i32_0 = arith.constant 0 : i32
    return %c0_i32, %arg0 : i32, i32
  }
}

</mosaic_0001>

<llo_original>
// kernel: tpu_custom_call.1
$region0: #{tpu_custom_call.1}
  #allocation0 [shape = 'u32[]', space=smem, size = 0x4, offset = 0x4, fixed_abs, tag = 'smem constant byte address 0x4 - core index']
  #allocation1 [shape = 'u32[144,128]{1,0:T(1,128)}', space=vmem, size = 0x12000, scoped, tag = 'internal scratch']
  #allocation2 [shape = 'f32[1,1]{1,0:T(1,128)S(6)}', space=smem, size = 0x200, scoped, tag = 'scoped memory for tpu_custom_call.1']
  %s0 = inlined_call_operand.hbm [shape: bf16[8,32], index: 0, kind: input, shape index: {}]
  %s1 = inlined_call_operand.hbm [shape: bf16[32,128], index: 1, kind: input, shape index: {}]
  %s2 = inlined_call_operand.vmem [shape: f32[1,128], index: 2, kind: input, shape index: {}]
  %s3 = inlined_call_operand.hbm [shape: bf16[128,128], index: 3, kind: input, shape index: {}]
  %s4 = inlined_call_operand.vmem [shape: f32[1,128], index: 4, kind: input, shape index: {}]
  %s5 = inlined_call_operand.vmem [shape: f32[1,128], index: 5, kind: input, shape index: {}]
  %s6 = inlined_call_operand.<no memory space> [shape: f32[1,1], index: 6, kind: input, shape index: {}]
  %s7 = inlined_call_operand.hbm [shape: f32[1,8], index: 7, kind: output, shape index: {}]
  %s8 = sld [smem:[#allocation0]]
  $region50: #{tpu_custom_call.1} parent=0
    _
  %s10 = ssub.s32 1, %s8
  %s11 = scalar_select 0, %s10, %s8
  %12 = sst [smem:[#allocation2]] %s6
  $region1: #{tpu_custom_call.1} parent=0
    #allocation3 [shape = 'u8[2048]{0}', space=vmem, size = 0x800, scoped, tag = 'input window, operand 0, single buffered']
    #allocation4 [shape = 's32[1]{0}', space=sflag, size = 0x4, scoped, tag = 'scoped memory for tpu_custom_call.1']
    #allocation5 [shape = 's32[1]{0}', space=sflag, size = 0x4, scoped, tag = 'scoped memory for tpu_custom_call.1']
    #allocation6 [shape = 'u8[8192]{0}', space=vmem, size = 0x2000, scoped, tag = 'input window, operand 1, single buffered']
    #allocation7 [shape = 's32[1]{0}', space=sflag, size = 0x4, scoped, tag = 'scoped memory for tpu_custom_call.1']
    #allocation8 [shape = 'u8[32768]{0}', space=vmem, size = 0x8000, scoped, tag = 'input window, operand 3, single buffered']
    #allocation9 [shape = 'u8[512]{0}', space=vmem, size = 0x400, scoped, tag = 'output window, operand 0, single buffered']
    %13 = vsyncpa [#allocation4], 0
    %14 = vsyncpa [#allocation7], 0
    %15 = vsyncpa [#allocation5], 0
    // Predicated region
    $region2: #{tpu_custom_call.1} parent=1 // pred_check
      _
    $region3: #{tpu_custom_call.1} parent=1 // pred_check_branch
      %17 = sbr.rel (0) target = $region5
    $region4: #{tpu_custom_call.1} parent=1 // pred_region
      %s19 = ssub.s32 64, 64
      %20 = vsyncadd [#allocation4], %s19
      %s22 = sshll.u32 [#allocation3], 4
      %s23 = int_to_ptr.vmem [resolvable:$true] %s22
      %25 = dma.hbm_to_vmem [thread:$0]  %s0, 64, %s23, [#allocation4]
    $region5: #{tpu_custom_call.1} parent=1 // pred_fallthru
      _
    // Predicated region
    $region6: #{tpu_custom_call.1} parent=1 // pred_check
      _
    $region7: #{tpu_custom_call.1} parent=1 // pred_check_branch
      %27 = sbr.rel (0) target = $region9
    $region8: #{tpu_custom_call.1} parent=1 // pred_region
      %s29 = ssub.s32 256, 256
      %30 = vsyncadd [#allocation7], %s29
      %s31 = sshll.u32 [#allocation6], 4
      %s32 = int_to_ptr.vmem [resolvable:$true] %s31
      %37 = dma.hbm_to_vmem [thread:$0]  %s1, 256, %s32, [#allocation7], 64, 64, 4
    $region9: #{tpu_custom_call.1} parent=1 // pred_fallthru
      _
    // Predicated region
    $region10: #{tpu_custom_call.1} parent=1 // pred_check
      _
    $region11: #{tpu_custom_call.1} parent=1 // pred_check_branch
      %39 = sbr.rel (0) target = $region13
    $region12: #{tpu_custom_call.1} parent=1 // pred_region
      _
    $region13: #{tpu_custom_call.1} parent=1 // pred_fallthru
      _
    // Predicated region
    $region14: #{tpu_custom_call.1} parent=1 // pred_check
      _
    $region15: #{tpu_custom_call.1} parent=1 // pred_check_branch
      %41 = sbr.rel (0) target = $region17
    $region16: #{tpu_custom_call.1} parent=1 // pred_region
      %s43 = ssub.s32 1024, 1024
      %44 = vsyncadd [#allocation7], %s43
      %s45 = sshll.u32 [#allocation8], 4
      %s46 = int_to_ptr.vmem [resolvable:$true] %s45
      %51 = dma.hbm_to_vmem [thread:$0]  %s3, 1024, %s46, [#allocation7], 64, 64, 4
    $region17: #{tpu_custom_call.1} parent=1 // pred_fallthru
      _
    // Predicated region
    $region18: #{tpu_custom_call.1} parent=1 // pred_check
      _
    $region19: #{tpu_custom_call.1} parent=1 // pred_check_branch
      %53 = sbr.rel (0) target = $region21
    $region20: #{tpu_custom_call.1} parent=1 // pred_region
      _
    $region21: #{tpu_custom_call.1} parent=1 // pred_fallthru
      _
    // Predicated region
    $region22: #{tpu_custom_call.1} parent=1 // pred_check
      _
    $region23: #{tpu_custom_call.1} parent=1 // pred_check_branch
      %55 = sbr.rel (0) target = $region25
    $region24: #{tpu_custom_call.1} parent=1 // pred_region
      _
    $region25: #{tpu_custom_call.1} parent=1 // pred_fallthru
      _
    // Predicated region
    $region26: #{tpu_custom_call.1} parent=1 // pred_check
      _
    $region27: #{tpu_custom_call.1} parent=1 // pred_check_branch
      %57 = sbr.rel (0) target = $region29
    $region28: #{tpu_custom_call.1} parent=1 // pred_region
      _
    $region29: #{tpu_custom_call.1} parent=1 // pred_fallthru
      _
    // Predicated region
    $region30: #{tpu_custom_call.1} parent=1 // pred_check
      _
    $region31: #{tpu_custom_call.1} parent=1 // pred_check_branch
      %59 = sbr.rel (0) target = $region33
    $region32: #{tpu_custom_call.1} parent=1 // pred_region
      %60 = dma.done [#allocation4], 64
    $region33: #{tpu_custom_call.1} parent=1 // pred_fallthru
      _
    // Predicated region
    $region34: #{tpu_custom_call.1} parent=1 // pred_check
      _
    $region35: #{tpu_custom_call.1} parent=1 // pred_check_branch
      %62 = sbr.rel (0) target = $region37
    $region36: #{tpu_custom_call.1} parent=1 // pred_region
      %63 = dma.done [#allocation7], 256
    $region37: #{tpu_custom_call.1} parent=1 // pred_fallthru
      _
    // Predicated region
    $region38: #{tpu_custom_call.1} parent=1 // pred_check
      _
    $region39: #{tpu_custom_call.1} parent=1 // pred_check_branch
      %65 = sbr.rel (0) target = $region41
    $region40: #{tpu_custom_call.1} parent=1 // pred_region
      %66 = dma.done [#allocation7], 1024
    $region41: #{tpu_custom_call.1} parent=1 // pred_fallthru
      _
    %v68 = vld [vmem:[#allocation3] sm:$0xf]
    %v69 = vld [vmem:[#allocation6] sm:$0xf]
    %v70 = vld [vmem:[#allocation6 + $0x4] sm:$0xf]
    %v71 = vld [vmem:[#allocation6 + $0x8] sm:$0xf]
    %v72 = vld [vmem:[#allocation6 + $0xc] sm:$0xf]
    %v73 = vld [vmem:[%s2] sm:$0x1]
    %v75 = vlaneseq
    %v76 = vshrl.u32 %v75, 7
    %v77 = vsub.s32 0, %v76
    %v78 = vrot.slane %v73, %v77
    %v84 = vunpack.c.l.b16 %v69
    %v85 = vunpack.c.l.b16 %v70
    %v86 = vunpack.c.l.b16 %v71
    %v87 = vunpack.c.l.b16 %v72
    %v88 = vpack.c.b16 %v85, %v84
    %v89 = vpack.c.b16 %v87, %v86
    %vm92 = vcmask 261120
    %v94 = vsel %vm92, %v68, 0
    %96 = vmatprep.subr.bf16.mxu0 0
    %97 = vmatpush1.bf16.msra.mxu0 0
    %98 = vmatprep.subr.bf16.mxu0 0
    %99 = vmatpush1.bf16.msra.mxu0 0
    %100 = vmatprep.subr.bf16.mxu0 0
    %101 = vmatpush1.bf16.msra.mxu0 0
    %102 = vmatprep.subr.bf16.mxu0 0
    %103 = vmatpush1.bf16.msra.mxu0 0
    %104 = vmatprep.subr.bf16.mxu0 0
    %105 = vmatpush1.bf16.msra.mxu0 0
    %106 = vmatprep.subr.bf16.mxu0 0
    %107 = vmatpush1.bf16.msra.mxu0 0
    %108 = vmatprep.subr.bf16.mxu0 0
    %109 = vmatpush1.bf16.msra.mxu0 %v89
    %110 = vmatprep.subr.bf16.mxu0 0
    %111 = vmatpush1.bf16.msra.mxu0 %v88
    %112 = vmatprep.subr.bf16.mxu0 0
    %113 = vmatpush2.bf16.msra.mxu0 0
    %114 = vmatprep.subr.bf16.mxu0 0
    %115 = vmatpush2.bf16.msra.mxu0 0
    %116 = vmatprep.subr.bf16.mxu0 0
    %117 = vmatpush2.bf16.msra.mxu0 0
    %118 = vmatprep.subr.bf16.mxu0 0
    %119 = vmatpush2.bf16.msra.mxu0 0
    %120 = vmatprep.subr.bf16.mxu0 0
    %121 = vmatpush2.bf16.msra.mxu0 0
    %122 = vmatprep.subr.bf16.mxu0 0
    %123 = vmatpush2.bf16.msra.mxu0 0
    %124 = vmatprep.subr.bf16.mxu0 0
    %125 = vmatpush2.bf16.msra.mxu0 0
    %126 = vmatprep.subr.bf16.mxu0 0
    %127 = vmatpush2.bf16.msra.mxu0 0
    %128 = vmatprep.mubr.bf16.mxu0 0
    %129 = vmatmul.mubr.bf16.gmra.mxu0 %v94
    %v130 = vpop.f32.mrf.mxu0
    %v131 = vadd.f32 %v78, %v130
    %v132 = vpop.f32.mrf.mxu0
    %v133 = vpop.f32.mrf.mxu0
    %v134 = vpop.f32.mrf.mxu0
    %135 = vdwg.mxu0
    %v136 = vmax.f32 %v131, 0.0
    %v137 = vpack.c.bf16 %v136, %v136
    %v138 = vld [vmem:[#allocation8] sm:$0xf]
    %v139 = vld [vmem:[#allocation8 + $0x4] sm:$0xf]
    %v140 = vld [vmem:[#allocation8 + $0x8] sm:$0xf]
    %v141 = vld [vmem:[#allocation8 + $0xc] sm:$0xf]
    %v142 = vld [vmem:[#allocation8 + $0x10] sm:$0xf]
    %v143 = vld [vmem:[#allocation8 + $0x14] sm:$0xf]
    %v144 = vld [vmem:[#allocation8 + $0x18] sm:$0xf]
    %v145 = vld [vmem:[#allocation8 + $0x1c] sm:$0xf]
    %v146 = vld [vmem:[#allocation8 + $0x20] sm:$0xf]
    %v147 = vld [vmem:[#allocation8 + $0x24] sm:$0xf]
    %v148 = vld [vmem:[#allocation8 + $0x28] sm:$0xf]
    %v149 = vld [vmem:[#allocation8 + $0x2c] sm:$0xf]
    %v150 = vld [vmem:[#allocation8 + $0x30] sm:$0xf]
    %v151 = vld [vmem:[#allocation8 + $0x34] sm:$0xf]
    %v152 = vld [vmem:[#allocation8 + $0x38] sm:$0xf]
    %v153 = vld [vmem:[#allocation8 + $0x3c] sm:$0xf]
    %v154 = vld [vmem:[%s4] sm:$0x1]
    %v156 = vlaneseq
    %v157 = vshrl.u32 %v156, 7
    %v158 = vsub.s32 0, %v157
    %v159 = vrot.slane %v154, %v158
    %v177 = vunpack.c.l.b16 %v138
    %v178 = vunpack.c.l.b16 %v139
    %v179 = vunpack.c.l.b16 %v140
    %v180 = vunpack.c.l.b16 %v141
    %v181 = vunpack.c.l.b16 %v142
    %v182 = vunpack.c.l.b16 %v143
    %v183 = vunpack.c.l.b16 %v144
    %v184 = vunpack.c.l.b16 %v145
    %v185 = vunpack.c.l.b16 %v146
    %v186 = vunpack.c.l.b16 %v147
    %v187 = vunpack.c.l.b16 %v148
    %v188 = vunpack.c.l.b16 %v149
    %v189 = vunpack.c.l.b16 %v150
    %v190 = vunpack.c.l.b16 %v151
    %v191 = vunpack.c.l.b16 %v152
    %v192 = vunpack.c.l.b16 %v153
    %v193 = vpack.c.b16 %v178, %v177
    %v194 = vpack.c.b16 %v180, %v179
    %v195 = vpack.c.b16 %v182, %v181
    %v196 = vpack.c.b16 %v184, %v183
    %v197 = vpack.c.b16 %v186, %v185
    %v198 = vpack.c.b16 %v188, %v187
    %v199 = vpack.c.b16 %v190, %v189
    %v200 = vpack.c.b16 %v192, %v191
    %209 = vmatprep.subr.bf16.mxu0 0
    %210 = vmatpush1.bf16.msra.mxu0 %v200
    %211 = vmatprep.subr.bf16.mxu0 0
    %212 = vmatpush1.bf16.msra.mxu0 %v199
    %213 = vmatprep.subr.bf16.mxu0 0
    %214 = vmatpush1.bf16.msra.mxu0 %v198
    %215 = vmatprep.subr.bf16.mxu0 0
    %216 = vmatpush1.bf16.msra.mxu0 %v197
    %217 = vmatprep.subr.bf16.mxu0 0
    %218 = vmatpush1.bf16.msra.mxu0 %v196
    %219 = vmatprep.subr.bf16.mxu0 0
    %220 = vmatpush1.bf16.msra.mxu0 %v195
    %221 = vmatprep.subr.bf16.mxu0 0
    %222 = vmatpush1.bf16.msra.mxu0 %v194
    %223 = vmatprep.subr.bf16.mxu0 0
    %224 = vmatpush1.bf16.msra.mxu0 %v193
    %225 = vmatprep.subr.bf16.mxu0 0
    %226 = vmatpush2.bf16.msra.mxu0 0
    %227 = vmatprep.subr.bf16.mxu0 0
    %228 = vmatpush2.bf16.msra.mxu0 0
    %229 = vmatprep.subr.bf16.mxu0 0
    %230 = vmatpush2.bf16.msra.mxu0 0
    %231 = vmatprep.subr.bf16.mxu0 0
    %232 = vmatpush2.bf16.msra.mxu0 0
    %233 = vmatprep.subr.bf16.mxu0 0
    %234 = vmatpush2.bf16.msra.mxu0 0
    %235 = vmatprep.subr.bf16.mxu0 0
    %236 = vmatpush2.bf16.msra.mxu0 0
    %237 = vmatprep.subr.bf16.mxu0 0
    %238 = vmatpush2.bf16.msra.mxu0 0
    %239 = vmatprep.subr.bf16.mxu0 0
    %240 = vmatpush2.bf16.msra.mxu0 0
    %241 = vmatprep.mubr.bf16.mxu0 0
    %242 = vmatmul.mubr.bf16.gmra.mxu0 %v137
    %v243 = vpop.f32.mrf.mxu0
    %v244 = vadd.f32 %v159, %v243
    %v245 = vpop.f32.mrf.mxu0
    %v246 = vpop.f32.mrf.mxu0
    %v247 = vpop.f32.mrf.mxu0
    %248 = vdwg.mxu0
    %v249 = vmax.f32 %v244, 0.0
    %v250 = vld [vmem:[%s5] sm:$0x1]
    %v252 = vlaneseq
    %v253 = vshrl.u32 %v252, 7
    %v254 = vsub.s32 0, %v253
    %v255 = vrot.slane %v250, %v254
    %v257 = vmul.f32 %v249, %v255
    %258 = vadd.xlane.f32.xlu0 %v257
    %v259 = vpop.xlane.xlu0 %258
    %s260 = sld [smem:[#allocation2]]
    %v261 = vstv %s260
    %v262 = vadd.f32 %v259, %v261
    %263 = vxpose.xlu0.b32.start [1/16] %v262, 128
    %264 = vxpose.xlu0.b32.cont [2/16] 0.0, 128
    %265 = vxpose.xlu0.b32.cont [3/16] 0.0, 128
    %266 = vxpose.xlu0.b32.cont [4/16] 0.0, 128
    %267 = vxpose.xlu0.b32.cont [5/16] 0.0, 128
    %268 = vxpose.xlu0.b32.cont [6/16] 0.0, 128
    %269 = vxpose.xlu0.b32.cont [7/16] 0.0, 128
    %270 = vxpose.xlu0.b32.cont [8/16] 0.0, 128
    %271 = vxpose.xlu0.b32.cont [9/16] 0.0, 128
    %272 = vxpose.xlu0.b32.cont [10/16] 0.0, 128
    %273 = vxpose.xlu0.b32.cont [11/16] 0.0, 128
    %274 = vxpose.xlu0.b32.cont [12/16] 0.0, 128
    %275 = vxpose.xlu0.b32.cont [13/16] 0.0, 128
    %276 = vxpose.xlu0.b32.cont [14/16] 0.0, 128
    %277 = vxpose.xlu0.b32.cont [15/16] 0.0, 128
    %278 = vxpose.xlu0.b32.end [16/16] 0.0, 128
    %v279 = vpop.trf.xlu0
    %v280 = vpop.trf.xlu0
    %v281 = vpop.trf.xlu0
    %v282 = vpop.trf.xlu0
    %v283 = vpop.trf.xlu0
    %v284 = vpop.trf.xlu0
    %v285 = vpop.trf.xlu0
    %v286 = vpop.trf.xlu0
    %v287 = vpop.trf.xlu0
    %v288 = vpop.trf.xlu0
    %v289 = vpop.trf.xlu0
    %v290 = vpop.trf.xlu0
    %v291 = vpop.trf.xlu0
    %v292 = vpop.trf.xlu0
    %v293 = vpop.trf.xlu0
    %v294 = vpop.trf.xlu0
    %vm295 = vcmask 57344
    %296 = vst.msk [vmem:[#allocation9] sm:$0x1] %vm295, %v279
    // Predicated region
    $region42: #{tpu_custom_call.1} parent=1 // pred_check
      _
    $region43: #{tpu_custom_call.1} parent=1 // pred_check_branch
      %298 = sbr.rel (0) target = $region45
    $region44: #{tpu_custom_call.1} parent=1 // pred_region
      %s300 = ssub.s32 16, 16
      %301 = vsyncadd [#allocation5], %s300
      %s303 = sshll.u32 [#allocation9], 4
      %s304 = int_to_ptr.vmem [resolvable:$true] %s303
      %306 = dma.vmem_to_hbm [thread:$0]  %s304, 16, %s7, [#allocation5]
    $region45: #{tpu_custom_call.1} parent=1 // pred_fallthru
      _
    // Predicated region
    $region46: #{tpu_custom_call.1} parent=1 // pred_check
      _
    $region47: #{tpu_custom_call.1} parent=1 // pred_check_branch
      %308 = sbr.rel (0) target = $region49
    $region48: #{tpu_custom_call.1} parent=1 // pred_region
      %309 = dma.done [#allocation5], 16
    $region49: #{tpu_custom_call.1} parent=1 // pred_fallthru
      _
    %310 = vsyncpa [#allocation4], 1
    %311 = vsyncpa [#allocation7], 1
    %312 = vsyncpa [#allocation5], 1

</llo_original>
